<compile_context>
chip_gen: v5e
topology: v5e:2x2
jax: 0.10.0
libtpu: 0.0.40
codegen_flags: <defaults>
</compile_context>

<pallas_src>
import functools

import jax
import jax.numpy as jnp
import numpy as np
from jax import lax
from jax.experimental import pallas as pl
from jax.experimental.pallas import tpu as pltpu


def _pixel_diff_kernel(x_ref, o_ref, *, w: int):
    # x_ref / o_ref: (TC, H*W) block; each row is one flattened (H, W) image.
    x = x_ref[...]
    col = lax.broadcasted_iota(jnp.int32, x.shape, 1)

    # Horizontal difference along the flattened lane axis: x[j] - x[j-1],
    # zeroed at the left edge of every image row (j % W == 0).
    left = x - pltpu.roll(x, shift=1, axis=1)
    left = jnp.where(lax.rem(col, w) == 0, jnp.zeros_like(x), left)

    # Vertical difference: x[j] - x[j-W], zeroed for the first image row.
    top = x - pltpu.roll(x, shift=w, axis=1)
    top = jnp.where(col < w, jnp.zeros_like(x), top)

    o_ref[...] = left + top


def _choose_block_rows(total: int, row_bytes: int, target_bytes: int = 2 << 20):
    """Return (tc, padded_total).

    tc is either == padded_total (single full block) or a multiple of 8 that
    divides padded_total, with tc * row_bytes ~<= target_bytes when possible.
    """
    if total <= 8 or total * row_bytes <= target_bytes:
        return total, total
    padded = total if total % 8 == 0 else ((total + 7) // 8) * 8
    mults = [d for d in range(8, padded + 1, 8) if padded % d == 0]
    fitting = [d for d in mults if d * row_bytes <= target_bytes]
    tc = max(fitting) if fitting else min(mults)
    return tc, padded


def pixel_difference(x: jax.Array) -> jax.Array:
    """x: (N, C, H, W) -> (N, C, H, W), same dtype."""
    N, C, H, W = x.shape
    total = N * C
    hw = H * W
    itemsize = jnp.dtype(x.dtype).itemsize
    row_bytes = hw * itemsize

    tc, padded = _choose_block_rows(total, row_bytes)
    grid = (padded // tc,)

    # Contiguous reshape (free); pad rows only when strictly required.
    xf = x.reshape(total, hw)
    if padded > total:
        xf = jnp.pad(xf, ((0, padded - total), (0, 0)))

    block_bytes = tc * row_bytes
    # Input + output, each double-buffered -> ~4 live blocks; leave headroom
    # but stay within v7x's 64 MiB physical VMEM.
    vmem_bytes = int(min(48 * 1024 * 1024, max(16 * 1024 * 1024, 6 * block_bytes)))

    spec = pl.BlockSpec((tc, hw), lambda i: (i, 0))

    out_flat = pl.pallas_call(
        functools.partial(_pixel_diff_kernel, w=W),
        out_shape=jax.ShapeDtypeStruct((padded, hw), x.dtype),
        grid_spec=pltpu.PrefetchScalarGridSpec(
            num_scalar_prefetch=0,
            grid=grid,
            in_specs=[spec],
            out_specs=spec,
        ),
        compiler_params=pltpu.CompilerParams(
            dimension_semantics=("parallel",),
            vmem_limit_bytes=vmem_bytes,
        ),
        cost_estimate=pl.CostEstimate(
            flops=3 * total * hw,
            transcendentals=0,
            bytes_accessed=2 * total * hw * itemsize,
        ),
    )(xf)

    if padded > total:
        out_flat = out_flat[:total]
    return out_flat.reshape(N, C, H, W)


def _reference(x: jax.Array) -> jax.Array:
    # Pure-JAX reference mirroring the PyTorch forward exactly.
    zcol = jnp.zeros_like(x[:, :, :, 0:1])
    zrow = jnp.zeros_like(x[:, :, 0:1, :])
    left_diff = jnp.concatenate([zcol, x[:, :, :, 1:] - x[:, :, :, :-1]], axis=3)
    top_diff = jnp.concatenate([zrow, x[:, :, 1:, :] - x[:, :, :-1, :]], axis=2)
    return left_diff + top_diff


if __name__ == "__main__":
    key = jax.random.PRNGKey(0)
    x = jax.random.normal(key, (2, 4, 16, 16), dtype=jnp.float32)

    out = pixel_difference(x)
    out = jax.block_until_ready(out)

    ref = jax.block_until_ready(_reference(x))
    np.testing.assert_allclose(np.asarray(out), np.asarray(ref), rtol=1e-6, atol=1e-6)

    print("KERNEL_OK")
</pallas_src>

<mosaic_0001>
module attributes {stable_mosaic.version = 11 : i64} {
  func.func @_pixel_diff_kernel(%arg0: i32, %arg1: memref<8x256xf32, #tpu.memory_space<vmem>>, %arg2: memref<8x256xf32, #tpu.memory_space<vmem>>) attributes {dimension_semantics = [#tpu.dimension_semantics<parallel>], iteration_bounds = array<i64: 1>, scalar_prefetch = 0 : i64, scratch_operands = 0 : i64, tpu.core_type = #tpu.core_type<tc>, window_params = [{transform_indices = @transform_0, window_bounds = array<i64: 8, 256>}, {transform_indices = @transform_1, window_bounds = array<i64: 8, 256>}]} {
    %c0 = arith.constant 0 : index
    %c0_0 = arith.constant 0 : index
    %0 = vector.load %arg1[%c0, %c0_0] : memref<8x256xf32, #tpu.memory_space<vmem>>, vector<8x256xf32>
    %1 = tpu.iota {dimensions = array<i32: 1>} : vector<8x256xi32>
    %c1_i32 = arith.constant 1 : i32
    %2 = tpu.dynamic_rotate %0 by %c1_i32 dim 1 : vector<8x256xf32>, i32 -> vector<8x256xf32>
    %3 = arith.subf %0, %2 : vector<8x256xf32>
    %c16_i32 = arith.constant 16 : i32
    %4 = vector.broadcast %c16_i32 : i32 to vector<8x256xi32>
    %5 = arith.remsi %1, %4 : vector<8x256xi32>
    %c0_i32 = arith.constant 0 : i32
    %6 = vector.broadcast %c0_i32 : i32 to vector<8x256xi32>
    %7 = arith.cmpi eq, %5, %6 : vector<8x256xi32>
    %cst = arith.constant 0.000000e+00 : f32
    %8 = vector.broadcast %cst : f32 to vector<8x256xf32>
    %9 = arith.select %7, %8, %3 : vector<8x256xi1>, vector<8x256xf32>
    %c16_i32_1 = arith.constant 16 : i32
    %10 = tpu.dynamic_rotate %0 by %c16_i32_1 dim 1 : vector<8x256xf32>, i32 -> vector<8x256xf32>
    %11 = arith.subf %0, %10 : vector<8x256xf32>
    %c16_i32_2 = arith.constant 16 : i32
    %12 = vector.broadcast %c16_i32_2 : i32 to vector<8x256xi32>
    %13 = arith.cmpi slt, %1, %12 : vector<8x256xi32>
    %cst_3 = arith.constant 0.000000e+00 : f32
    %14 = vector.broadcast %cst_3 : f32 to vector<8x256xf32>
    %15 = arith.select %13, %14, %11 : vector<8x256xi1>, vector<8x256xf32>
    %16 = arith.addf %9, %15 : vector<8x256xf32>
    %c0_4 = arith.constant 0 : index
    %c0_5 = arith.constant 0 : index
    %17 = vector.load %arg2[%c0_4, %c0_5] : memref<8x256xf32, #tpu.memory_space<vmem>>, vector<8x256xf32>
    tpu.vector_store %arg2[%c0_4, %c0_5], %16 {strides = array<i32>} : memref<8x256xf32, #tpu.memory_space<vmem>>, vector<8x256xf32>,
    return
  }
  func.func @transform_0(%arg0: i32) -> (i32, i32) {
    %c0_i32 = arith.constant 0 : i32
    %c0_i32_0 = arith.constant 0 : i32
    return %arg0, %c0_i32 : i32, i32
  }
  func.func @transform_1(%arg0: i32) -> (i32, i32) {
    %c0_i32 = arith.constant 0 : i32
    %c0_i32_0 = arith.constant 0 : i32
    return %arg0, %c0_i32 : i32, i32
  }
}

</mosaic_0001>

<llo_original>
// kernel: tpu_custom_call.1
$region0: #{tpu_custom_call.1}
  #allocation0 [shape = 'u32[]', space=smem, size = 0x4, offset = 0x4, fixed_abs, tag = 'smem constant byte address 0x4 - core index']
  #allocation1 [shape = 'u32[72,128]{1,0:T(1,128)}', space=vmem, size = 0x9000, scoped, tag = 'internal scratch']
  %s0 = inlined_call_operand.hbm [shape: f32[8,256], index: 0, kind: input, shape index: {}]
  %s1 = inlined_call_operand.hbm [shape: f32[8,256], index: 1, kind: output, shape index: {}]
  %s2 = sld [smem:[#allocation0]]
  $region18: #{tpu_custom_call.1} parent=0
    _
  %s4 = ssub.s32 1, %s2
  %s5 = scalar_select 0, %s4, %s2
  $region1: #{tpu_custom_call.1} parent=0
    #allocation2 [shape = 'u8[8192]{0}', space=vmem, size = 0x2000, scoped, tag = 'input window, operand 0, single buffered']
    #allocation3 [shape = 's32[1]{0}', space=sflag, size = 0x4, scoped, tag = 'scoped memory for tpu_custom_call.1']
    #allocation4 [shape = 's32[1]{0}', space=sflag, size = 0x4, scoped, tag = 'scoped memory for tpu_custom_call.1']
    #allocation5 [shape = 'u8[8192]{0}', space=vmem, size = 0x2000, scoped, tag = 'output window, operand 0, single buffered']
    %6 = vsyncpa [#allocation3], 0
    %7 = vsyncpa [#allocation4], 0
    // Predicated region
    $region2: #{tpu_custom_call.1} parent=1 // pred_check
      _
    $region3: #{tpu_custom_call.1} parent=1 // pred_check_branch
      %9 = sbr.rel (0) target = $region5
    $region4: #{tpu_custom_call.1} parent=1 // pred_region
      %11 = vsyncadd [#allocation3], 0
      %s13 = sshll.u32 %s0, 4
      %s14 = int_to_ptr.hbm [resolvable:$true] %s13
      %s15 = sshll.u32 [#allocation2], 4
      %s16 = int_to_ptr.vmem [resolvable:$true] %s15
      %18 = dma.hbm_to_vmem [thread:$0]  %s14, 256, %s16, [#allocation3]
    $region5: #{tpu_custom_call.1} parent=1 // pred_fallthru
      _
    // Predicated region
    $region6: #{tpu_custom_call.1} parent=1 // pred_check
      _
    $region7: #{tpu_custom_call.1} parent=1 // pred_check_branch
      %20 = sbr.rel (0) target = $region9
    $region8: #{tpu_custom_call.1} parent=1 // pred_region
      %22 = dma.done [#allocation3], 256
    $region9: #{tpu_custom_call.1} parent=1 // pred_fallthru
      _
    %v23 = vld [vmem:[#allocation2] sm:$0xff]
    %v24 = vld [vmem:[#allocation2 + $0x8] sm:$0xff]
    %v25 = vlaneseq
    %v26 = vand.u32 %v25, 127
    %v27 = vadd.s32 %v26, 128
    %28 = vrot.lane.b32.xlu0 %v23, 1
    %v29 = vpop.permute.xlu0 %28
    %30 = vrot.lane.b32.xlu0 %v24, 1
    %v31 = vpop.permute.xlu0 %30
    %vm32 = vcmp.lt.s32.totalorder %v26, 1
    %v33 = vsel %vm32, %v29, %v31
    %v34 = vsel %vm32, %v31, %v29
    %v35 = vsub.f32 %v23, %v34
    %v36 = vsub.f32 %v24, %v33
    %vm37 = vcmp.lt.s32.totalorder %v26, 0
    %v38 = vsub.s32 0, %v26
    %v39 = vsel %vm37, %v38, %v26
    %v40 = vshrl.u32 %v39, 4
    %v41 = vand.u32 %v39, 15
    %v42 = vsub.s32 0, %v41
    %v43 = vsel %vm37, %v42, %v41
    %vm44 = vcmp.lt.s32.totalorder %v27, 0
    %v45 = vsub.s32 0, %v27
    %v46 = vsel %vm44, %v45, %v27
    %v47 = vshrl.u32 %v46, 4
    %v48 = vand.u32 %v46, 15
    %v49 = vsub.s32 0, %v48
    %v50 = vsel %vm44, %v49, %v48
    %vm51 = vcmp.eq.s32.totalorder %v43, 0
    %vm52 = vcmp.eq.s32.totalorder %v50, 0
    %v53 = vsel %vm51, 0.0, %v35
    %v54 = vsel %vm52, 0.0, %v36
    %55 = vrot.lane.b32.xlu0 %v23, 16
    %v56 = vpop.permute.xlu0 %55
    %57 = vrot.lane.b32.xlu0 %v24, 16
    %v58 = vpop.permute.xlu0 %57
    %vm59 = vcmp.lt.s32.totalorder %v26, 16
    %v60 = vsel %vm59, %v56, %v58
    %v61 = vsel %vm59, %v58, %v56
    %v62 = vsub.f32 %v23, %v61
    %v63 = vsub.f32 %v24, %v60
    %vm64 = vcmp.lt.s32.totalorder %v27, 16
    %v65 = vsel %vm59, 0.0, %v62
    %v66 = vsel %vm64, 0.0, %v63
    %v67 = vadd.f32 %v53, %v65
    %v68 = vadd.f32 %v54, %v66
    %69 = vst [vmem:[#allocation5] sm:$0xff] %v67
    %70 = vst [vmem:[#allocation5 + $0x8] sm:$0xff] %v68
    // Predicated region
    $region10: #{tpu_custom_call.1} parent=1 // pred_check
      _
    $region11: #{tpu_custom_call.1} parent=1 // pred_check_branch
      %72 = sbr.rel (0) target = $region13
    $region12: #{tpu_custom_call.1} parent=1 // pred_region
      %74 = vsyncadd [#allocation4], 0
      %s76 = sshll.u32 [#allocation5], 4
      %s77 = int_to_ptr.vmem [resolvable:$true] %s76
      %s78 = sshll.u32 %s1, 4
      %s79 = int_to_ptr.hbm [resolvable:$true] %s78
      %81 = dma.vmem_to_hbm [thread:$0]  %s77, 256, %s79, [#allocation4]
    $region13: #{tpu_custom_call.1} parent=1 // pred_fallthru
      _
    // Predicated region
    $region14: #{tpu_custom_call.1} parent=1 // pred_check
      _
    $region15: #{tpu_custom_call.1} parent=1 // pred_check_branch
      %83 = sbr.rel (0) target = $region17
    $region16: #{tpu_custom_call.1} parent=1 // pred_region
      %85 = dma.done [#allocation4], 256
    $region17: #{tpu_custom_call.1} parent=1 // pred_fallthru
      _
    %86 = vsyncpa [#allocation3], 1
    %87 = vsyncpa [#allocation4], 1

</llo_original>
